<compile_context>
chip_gen: v7x
topology: tpu7x:2x2x1
jax: 0.10.0
libtpu: 0.0.40
codegen_flags: <defaults>
</compile_context>

<pallas_src>
import functools
import math

import jax
import jax.numpy as jnp
import numpy as np
from jax.experimental import pallas as pl
from jax.experimental.pallas import tpu as pltpu

KERNEL_SIZES = (3, 7, 11)
KMAX = max(KERNEL_SIZES)      # 11
RAD = KMAX // 2               # 5
TOP_ROWS = 8                  # >= RAD; 8*W keeps the interior store 128-aligned (W=16)
BOT_ROWS = 8                  # >= RAD


def _sab_kernel(x_ref, m_ref, o_ref, pad_ref, *, pad_len, top_w, hw):
    """One grid step processes Nb batch elements.

    x_ref   : (Nb, C, HW)         VMEM, lane-dense
    m_ref   : (2*pad_len, HW)     VMEM, banded merged-conv matrix (constant block)
    o_ref   : (Nb, C, HW)         VMEM, lane-dense
    pad_ref : (Nb, 2*pad_len)     VMEM scratch -- flattened zero-padded [avg ; max]
    """
    x = x_ref[...]                                    # (Nb, C, HW) f32
    c = x_ref.shape[1]
    avg = jnp.sum(x, axis=1) * (1.0 / c)              # (Nb, HW)
    mx = jnp.max(x, axis=1)                           # (Nb, HW)

    # Coalesced zero of the whole (small) scratch in one aligned store, then
    # 128-lane-aligned interior writes.  (A once-only zeroing would be unsafe
    # with the "parallel" batch axis on multi-core parts.)
    pad_ref[...] = jnp.zeros(pad_ref.shape, pad_ref.dtype)
    pad_ref[:, top_w:top_w + hw] = avg
    pad_ref[:, pad_len + top_w:pad_len + top_w + hw] = mx

    # All 242 taps of the merged 11x11x2 convolution in a single MXU matmul.
    conv = jnp.dot(pad_ref[...], m_ref[...],
                   preferred_element_type=jnp.float32)          # (Nb, HW)
    att = jax.nn.sigmoid(conv)
    o_ref[...] = x * att[:, None, :]


def _merge_weights(weights):
    """Embed the 3x3 / 7x7 kernels into 11x11, sum, pre-scale by 1/3 (exact)."""
    merged = jnp.zeros((2, KMAX, KMAX), jnp.float32)
    for k in KERNEL_SIZES:
        off = (KMAX - k) // 2
        merged = merged.at[:, off:off + k, off:off + k].add(
            weights[k][0].astype(jnp.float32))
    return merged * (1.0 / len(KERNEL_SIZES))


def _build_band_matrix(w_merged, H, W):
    """Banded (2*pad_len, H*W) matrix M s.t. pad_flat @ M == merged SAME conv."""
    HW = H * W
    pad_len = (TOP_ROWS + H + BOT_ROWS) * W
    hh, ww = np.meshgrid(np.arange(H), np.arange(W), indexing="ij")
    p_all = (hh * W + ww).reshape(-1)                      # output flat index
    rows, cols, taps = [], [], []
    for c in range(2):
        for dy in range(KMAX):
            r_base = (hh + dy + (TOP_ROWS - RAD)) * W      # padded-row base
            for dx in range(KMAX):
                ws = ww + dx - RAD                         # source column
                valid = ((ws >= 0) & (ws < W)).reshape(-1)
                q_all = (c * pad_len + r_base + ws).reshape(-1)
                rows.append(q_all[valid])
                cols.append(p_all[valid])
                taps.append(np.full(int(valid.sum()),
                                    c * KMAX * KMAX + dy * KMAX + dx))
    rows = np.concatenate(rows).astype(np.int32)
    cols = np.concatenate(cols).astype(np.int32)
    taps = np.concatenate(taps).astype(np.int32)
    vals = w_merged.reshape(-1)[taps]
    m = jnp.zeros((2 * pad_len, HW), jnp.float32).at[rows, cols].add(vals)
    return m, pad_len


def _pick_batch_block(n, c, hw, *, vmem_cap):
    """Batch elements per grid step.

    - double-buffered in+out blocks must fit a chip-aware VMEM budget
      (~28 MiB on 128-MiB v5e/v6e, ~16 MiB on 64-MiB v7x),
    - bounded by a vreg-pressure cap on the live x block,
    - capped at n//2 so there are >= 2 grid steps whenever n >= 2
      (the "parallel" batch axis then feeds both v7x TensorCores).
    """
    budget = min(28 * 2**20, max(vmem_cap // 4, 4 * 2**20))
    per_elem = 2 * 2 * c * hw * 4               # in + out, double-buffered
    vreg_cap = max(1, (24 * 1024) // (c * hw))  # ~24 vregs of f32 block data
    max_nb = n // 2 if n >= 2 else n
    nb = 1
    for cand in range(1, max_nb + 1):
        if n % cand == 0 and cand * per_elem <= budget and cand <= vreg_cap:
            nb = cand
    return nb


def spatial_attention_block(x, weights):
    """x: (N, C, H, W) f32; weights: dict k -> (1, 2, k, k) f32 (bias-free convs)."""
    n, c, h, w = x.shape
    hw = h * w
    x = x.astype(jnp.float32)

    w_merged = _merge_weights(weights)
    m, pad_len = _build_band_matrix(w_merged, h, w)
    top_w = TOP_ROWS * w

    try:
        vmem_cap = int(pltpu.get_tpu_info().vmem_capacity_bytes)
    except Exception:
        vmem_cap = 64 * 2**20                   # safe lower bound (v7x per-TC VMEM)

    nb = _pick_batch_block(n, c, hw, vmem_cap=vmem_cap)
    xf = x.reshape(n, c, hw)                    # lane-dense slab (HW = 256 lanes)

    block_bytes = nb * c * hw * 4
    m_bytes = 2 * pad_len * hw * 4
    scratch_bytes = nb * 2 * pad_len * 4
    needed = 4 * block_bytes + 2 * m_bytes + scratch_bytes + (4 << 20)
    vmem_limit = int(min(max(needed, 32 << 20), vmem_cap - (16 << 20)))

    cost = pl.CostEstimate(
        flops=int(2 * n * (2 * pad_len) * hw + 6 * n * c * hw),
        transcendentals=int(n * hw),
        bytes_accessed=int(2 * n * c * hw * 4 + 2 * pad_len * hw * 4),
    )

    kernel = functools.partial(_sab_kernel, pad_len=pad_len, top_w=top_w, hw=hw)

    out = pl.pallas_call(
        kernel,
        out_shape=jax.ShapeDtypeStruct((n, c, hw), jnp.float32),
        grid_spec=pltpu.PrefetchScalarGridSpec(
            num_scalar_prefetch=0,
            grid=(n // nb,),
            in_specs=[
                pl.BlockSpec((nb, c, hw), lambda i: (i, 0, 0)),
                pl.BlockSpec((2 * pad_len, hw), lambda i: (0, 0)),
            ],
            out_specs=pl.BlockSpec((nb, c, hw), lambda i: (i, 0, 0)),
            scratch_shapes=[pltpu.VMEM((nb, 2 * pad_len), jnp.float32)],
        ),
        compiler_params=pltpu.CompilerParams(
            dimension_semantics=("parallel",),
            vmem_limit_bytes=vmem_limit),
        cost_estimate=cost,
    )(xf, m)
    return out.reshape(n, c, h, w)


def _reference(x, weights):
    """Pure-JAX reference mirroring the PyTorch forward (bias=False convs)."""
    avg = jnp.mean(x, axis=1, keepdims=True)
    mx = jnp.max(x, axis=1, keepdims=True)
    comb = jnp.concatenate([avg, mx], axis=1)          # (N, 2, H, W)
    maps = []
    for k in KERNEL_SIZES:
        out = jax.lax.conv_general_dilated(
            comb, weights[k], window_strides=(1, 1),
            padding=[(k // 2, k // 2), (k // 2, k // 2)],
            dimension_numbers=("NCHW", "OIHW", "NCHW"),
            precision=jax.lax.Precision.HIGHEST)
        maps.append(out)
    att = jax.nn.sigmoid(jnp.mean(jnp.stack(maps), axis=0))
    return x * att


def _init_weights(key):
    """Deterministic init matching PyTorch Conv2d(bias=False) shapes (1, 2, k, k)."""
    weights = {}
    for i, k in enumerate(KERNEL_SIZES):
        subkey = jax.random.fold_in(key, i)
        fan_in = 2 * k * k
        bound = 1.0 / math.sqrt(fan_in)
        weights[k] = jax.random.uniform(
            subkey, (1, 2, k, k), jnp.float32, minval=-bound, maxval=bound)
    return weights


if __name__ == "__main__":
    key = jax.random.PRNGKey(0)
    kx, kw = jax.random.split(key)

    N, C, H, W = 2, 4, 16, 16
    x = jax.random.normal(kx, (N, C, H, W), dtype=jnp.float32)
    weights = _init_weights(kw)

    out = jax.block_until_ready(spatial_attention_block(x, weights))
    ref = jax.block_until_ready(_reference(x, weights))

    # Tolerance absorbs MXU multi-pass f32 vs XLA-conv accumulation-order
    # differences; any indexing/structural bug would be orders larger.
    np.testing.assert_allclose(np.asarray(out), np.asarray(ref),
                               rtol=2e-3, atol=2e-3)

    print("KERNEL_OK")
</pallas_src>

<mosaic_0001>
module attributes {stable_mosaic.version = 11 : i64} {
  func.func @_sab_kernel(%arg0: i32, %arg1: memref<1x4x256xf32, #tpu.memory_space<vmem>>, %arg2: memref<1024x256xf32, #tpu.memory_space<vmem>>, %arg3: memref<1x4x256xf32, #tpu.memory_space<vmem>>, %arg4: memref<1x1024xf32, #tpu.memory_space<vmem>>) attributes {dimension_semantics = [#tpu.dimension_semantics<parallel>], iteration_bounds = array<i64: 2>, scalar_prefetch = 0 : i64, scratch_operands = 1 : i64, tpu.core_type = #tpu.core_type<tc>, window_params = [{transform_indices = @transform_0, window_bounds = array<i64: 1, 4, 256>}, {pipeline_mode = #tpu.pipeline_mode<synchronous>, transform_indices = @transform_1, window_bounds = array<i64: 1024, 256>}, {transform_indices = @transform_2, window_bounds = array<i64: 1, 4, 256>}]} {
    %c0 = arith.constant 0 : index
    %c0_0 = arith.constant 0 : index
    %c0_1 = arith.constant 0 : index
    %0 = vector.load %arg1[%c0, %c0_0, %c0_1] : memref<1x4x256xf32, #tpu.memory_space<vmem>>, vector<1x4x256xf32>
    %cst = arith.constant dense<0.000000e+00> : vector<1x256xf32>
    %1 = vector.multi_reduction <add>, %0, %cst [1] : vector<1x4x256xf32> to vector<1x256xf32>
    %cst_2 = arith.constant 2.500000e-01 : f32
    %2 = vector.broadcast %cst_2 : f32 to vector<1x256xf32>
    %3 = arith.mulf %1, %2 : vector<1x256xf32>
    %cst_3 = arith.constant dense<0xFF800000> : vector<1x256xf32>
    %4 = vector.multi_reduction <maximumf>, %0, %cst_3 [1] : vector<1x4x256xf32> to vector<1x256xf32>
    %cst_4 = arith.constant 0.000000e+00 : f32
    %5 = vector.broadcast %cst_4 : f32 to vector<1x1024xf32>
    %c0_5 = arith.constant 0 : index
    %c0_6 = arith.constant 0 : index
    %6 = vector.load %arg4[%c0_5, %c0_6] : memref<1x1024xf32, #tpu.memory_space<vmem>>, vector<1x1024xf32>
    tpu.vector_store %arg4[%c0_5, %c0_6], %5 {strides = array<i32>} : memref<1x1024xf32, #tpu.memory_space<vmem>>, vector<1x1024xf32>,
    %c0_7 = arith.constant 0 : index
    %c128 = arith.constant 128 : index
    %7 = vector.load %arg4[%c0_7, %c128] : memref<1x1024xf32, #tpu.memory_space<vmem>>, vector<1x256xf32>
    tpu.vector_store %arg4[%c0_7, %c128], %3 {strides = array<i32>} : memref<1x1024xf32, #tpu.memory_space<vmem>>, vector<1x256xf32>,
    %c0_8 = arith.constant 0 : index
    %c640 = arith.constant 640 : index
    %8 = vector.load %arg4[%c0_8, %c640] : memref<1x1024xf32, #tpu.memory_space<vmem>>, vector<1x256xf32>
    tpu.vector_store %arg4[%c0_8, %c640], %4 {strides = array<i32>} : memref<1x1024xf32, #tpu.memory_space<vmem>>, vector<1x256xf32>,
    %c0_9 = arith.constant 0 : index
    %c0_10 = arith.constant 0 : index
    %9 = vector.load %arg4[%c0_9, %c0_10] : memref<1x1024xf32, #tpu.memory_space<vmem>>, vector<1x1024xf32>
    %c0_11 = arith.constant 0 : index
    %c0_12 = arith.constant 0 : index
    %10 = vector.load %arg2[%c0_11, %c0_12] : memref<1024x256xf32, #tpu.memory_space<vmem>>, vector<1024x256xf32>
    %cst_13 = arith.constant dense<0.000000e+00> : vector<1x256xf32>
    %11 = tpu.matmul %9, %10, %cst_13 {dimension_numbers = #tpu.dot_dimension_numbers<[1], [0], [0], [1], [0, 0, 1, 1], [], []>} : vector<1x1024xf32>, vector<1024x256xf32>, vector<1x256xf32> -> vector<1x256xf32>
    %12 = arith.negf %11 : vector<1x256xf32>
    %13 = math.exp %12 : vector<1x256xf32>
    %cst_14 = arith.constant 1.000000e+00 : f32
    %14 = vector.broadcast %cst_14 : f32 to vector<1x256xf32>
    %15 = arith.addf %14, %13 : vector<1x256xf32>
    %16 = arith.divf %14, %15 : vector<1x256xf32>
    %17 = vector.shape_cast %16 : vector<1x256xf32> to vector<1x1x256xf32>
    %18 = vector.broadcast %17 : vector<1x1x256xf32> to vector<1x4x256xf32>
    %19 = arith.mulf %0, %18 : vector<1x4x256xf32>
    %c0_15 = arith.constant 0 : index
    %c0_16 = arith.constant 0 : index
    %c0_17 = arith.constant 0 : index
    %20 = vector.load %arg3[%c0_15, %c0_16, %c0_17] : memref<1x4x256xf32, #tpu.memory_space<vmem>>, vector<1x4x256xf32>
    tpu.vector_store %arg3[%c0_15, %c0_16, %c0_17], %19 {strides = array<i32>} : memref<1x4x256xf32, #tpu.memory_space<vmem>>, vector<1x4x256xf32>,
    return
  }
  func.func @transform_0(%arg0: i32) -> (i32, i32, i32) {
    %c0_i32 = arith.constant 0 : i32
    %c0_i32_0 = arith.constant 0 : i32
    %c0_i32_1 = arith.constant 0 : i32
    return %arg0, %c0_i32, %c0_i32_0 : i32, i32, i32
  }
  func.func @transform_1(%arg0: i32) -> (i32, i32) {
    %c0_i32 = arith.constant 0 : i32
    %c0_i32_0 = arith.constant 0 : i32
    %c0_i32_1 = arith.constant 0 : i32
    return %c0_i32, %c0_i32_0 : i32, i32
  }
  func.func @transform_2(%arg0: i32) -> (i32, i32, i32) {
    %c0_i32 = arith.constant 0 : i32
    %c0_i32_0 = arith.constant 0 : i32
    %c0_i32_1 = arith.constant 0 : i32
    return %arg0, %c0_i32, %c0_i32_0 : i32, i32, i32
  }
}

</mosaic_0001>

<llo_original>
// kernel: tpu_custom_call.1
$region0: #{tpu_custom_call.1}
  #allocation0 [shape = 'u32[]', space=smem, size = 0x4, offset = 0x4, fixed_abs, tag = 'smem constant byte address 0x4 - core index']
  #allocation1 [shape = 'u32[144,128]{1,0:T(1,128)}', space=vmem, size = 0x12000, scoped, tag = 'internal scratch']
  #allocation2 [shape = 'f32[1,1024]{1,0:T(1,128)}', space=vmem, size = 0x1000, scoped, tag = 'scratch operand']
  %s0 = inlined_call_operand.hbm [shape: f32[2,4,256], index: 0, kind: input, shape index: {}]
  %s1 = inlined_call_operand.hbm [shape: f32[1024,256], index: 1, kind: input, shape index: {}]
  %s2 = inlined_call_operand.hbm [shape: f32[2,4,256], index: 2, kind: output, shape index: {}]
  %s3 = sld [smem:[#allocation0]]
  $region49: #{tpu_custom_call.1} parent=0
    _
  %s5 = ssub.s32 1, %s3
  %s6 = scalar_select 0, %s5, %s3
  $region1: #{tpu_custom_call.1} parent=0
    #allocation3 [shape = 'u8[8192]{0}', space=vmem, size = 0x2000, scoped, tag = 'input window, operand 0']
    #allocation4 [shape = 's32[2]{0}', space=sflag, size = 0x8, scoped, tag = 'scoped memory for tpu_custom_call.1']
    #allocation5 [shape = 's32[2]{0}', space=sflag, size = 0x8, scoped, tag = 'scoped memory for tpu_custom_call.1']
    #allocation6 [shape = 'u8[1048576]{0}', space=vmem, size = 0x100000, scoped, tag = 'input window, operand 1, single buffered']
    #allocation7 [shape = 's32[1]{0}', space=sflag, size = 0x4, scoped, tag = 'scoped memory for tpu_custom_call.1']
    #allocation8 [shape = 'u8[8192]{0}', space=vmem, size = 0x2000, scoped, tag = 'output window, operand 0']
    %7 = vsyncpa [#allocation4], 0
    %s8 = scalar_lea.sflag [#allocation4], 1
    %9 = vsyncpa %s8, 0
    %10 = vsyncpa [#allocation7], 0
    %11 = vsyncpa [#allocation5], 0
    %s12 = scalar_lea.sflag [#allocation5], 1
    %13 = vsyncpa %s12, 0
    loop: start=0, step=1, limit=4
    $region2: #{tpu_custom_call.1} parent=1 // loop_pre_header
      _
    $region3: #{tpu_custom_call.1} parent=1 // loop_header
      %s15 = sphi 0, %s19
      %p16 = scmp.ge.s32.totalorder %s15, 4
      %s25 = sphi 0, %s27
      %s28 = sphi 0, %s25
      %s29 = sphi 0, %s28
      %s45 = sphi 0, %s29
      %s49 = sphi 0, %s49
      %s51 = sphi 0, %s49
      %s52 = sphi 0, %s51
      %s66 = sphi 0, %s52
      %s72 = sphi 0, %s74
      %s75 = sphi 0, %s72
      %s76 = sphi 0, %s75
      %s92 = sphi 0, %s76
    $region4: #{tpu_custom_call.1} parent=1 // loop_header_branch
      %18 = sbr.rel (%p16) target = $region8
    $region5: #{tpu_custom_call.1} parent=1 // loop_body
      %s20 = ssub.s32 %s15, 1
      %s21 = ssub.s32 %s15, 2
      %s22 = sadd.s32 %s15, 1
      %s23 = ssub.s32 %s15, %s22
      %p24 = scmp.eq.s32.totalorder %s23, 0
      %s26 = sadd.s32 %s25, 1
      %s27 = scalar_select %p24, %s25, %s26
      %p30 = pneg %p24
      %p31 = scmp.eq.s32.totalorder %s15, 1
      %p32 = por %p30, %p31
      %p33 = scmp.ne.s32.totalorder %s25, %s28
      %p34 = scmp.eq.s32.totalorder %s15, 0
      %p35 = por %p33, %p34
      %p36 = scmp.ne.s32.totalorder %s25, %s28
      %p37 = scmp.eq.s32.totalorder %s20, 1
      %p38 = por %p36, %p37
      %p39 = scmp.ne.s32.totalorder %s28, %s29
      %p40 = scmp.eq.s32.totalorder %s20, 0
      %p41 = por %p39, %p40
      %p42 = scmp.ne.s32.totalorder %s28, %s29
      %p43 = scmp.eq.s32.totalorder %s21, 1
      %p44 = por %p42, %p43
      %p46 = scmp.ne.s32.totalorder %s29, %s45
      %p47 = scmp.eq.s32.totalorder %s21, 0
      %p48 = por %p46, %p47
      %s50 = sadd.s32 %s49, 1
      %p53 = scmp.eq.s32.totalorder %s15, 1
      %p54 = scmp.ne.s32.totalorder %s49, %s51
      %p55 = scmp.eq.s32.totalorder %s15, 0
      %p56 = por %p54, %p55
      %p57 = scmp.ne.s32.totalorder %s49, %s51
      %p58 = scmp.eq.s32.totalorder %s20, 1
      %p59 = por %p57, %p58
      %p60 = scmp.ne.s32.totalorder %s51, %s52
      %p61 = scmp.eq.s32.totalorder %s20, 0
      %p62 = por %p60, %p61
      %p63 = scmp.ne.s32.totalorder %s51, %s52
      %p64 = scmp.eq.s32.totalorder %s21, 1
      %p65 = por %p63, %p64
      %p67 = scmp.ne.s32.totalorder %s52, %s66
      %p68 = scmp.eq.s32.totalorder %s21, 0
      %p69 = por %p67, %p68
      %s70 = ssub.s32 %s15, %s22
      %p71 = scmp.eq.s32.totalorder %s70, 0
      %s73 = sadd.s32 %s72, 1
      %s74 = scalar_select %p71, %s72, %s73
      %p77 = pneg %p71
      %p78 = scmp.eq.s32.totalorder %s15, 1
      %p79 = por %p77, %p78
      %p80 = scmp.ne.s32.totalorder %s72, %s75
      %p81 = scmp.eq.s32.totalorder %s15, 0
      %p82 = por %p80, %p81
      %p83 = scmp.ne.s32.totalorder %s72, %s75
      %p84 = scmp.eq.s32.totalorder %s20, 1
      %p85 = por %p83, %p84
      %p86 = scmp.ne.s32.totalorder %s75, %s76
      %p87 = scmp.eq.s32.totalorder %s20, 0
      %p88 = por %p86, %p87
      %p89 = scmp.ne.s32.totalorder %s75, %s76
      %p90 = scmp.eq.s32.totalorder %s21, 1
      %p91 = por %p89, %p90
      %p93 = scmp.ne.s32.totalorder %s76, %s92
      %p94 = scmp.eq.s32.totalorder %s21, 0
      %p95 = por %p93, %p94
      %p96 = scmp.le.s32.totalorder 1, %s15
      %p97 = scmp.lt.s32.totalorder %s15, 3
      %p98 = pnand %p96, %p97
      %p99 = pneg %p98
      // Predicated region
      $region9: #{tpu_custom_call.1} parent=5 // pred_check
        _
      $region10: #{tpu_custom_call.1} parent=5 // pred_check_branch
        %101 = sbr.rel (%p98) target = $region12
      $region11: #{tpu_custom_call.1} parent=5 // pred_region
        %s102 = ssub.s32 %s15, 1
        // Predicated region
        $region13: #{tpu_custom_call.1} parent=11 // pred_check
          %p103 = pneg %p62
        $region14: #{tpu_custom_call.1} parent=11 // pred_check_branch
          %105 = sbr.rel (%p103) target = $region16
        $region15: #{tpu_custom_call.1} parent=11 // pred_region
          %s107 = ssub.s32 32768, 32768
          %108 = vsyncadd [#allocation7], %s107
          %s109 = sshll.u32 [#allocation6], 4
          %s110 = int_to_ptr.vmem [resolvable:$true] %s109
          %115 = dma.hbm_to_vmem [thread:$0]  %s1, 32768, %s110, [#allocation7], 256, 256, 16
        $region16: #{tpu_custom_call.1} parent=11 // pred_fallthru
          _
      $region12: #{tpu_custom_call.1} parent=5 // pred_fallthru
        _
      %p116 = scmp.lt.s32.totalorder %s15, 2
      // Predicated region
      $region17: #{tpu_custom_call.1} parent=5 // pred_check
        %p117 = pneg %p116
      $region18: #{tpu_custom_call.1} parent=5 // pred_check_branch
        %119 = sbr.rel (%p117) target = $region20
      $region19: #{tpu_custom_call.1} parent=5 // pred_region
        // Predicated region
        $region21: #{tpu_custom_call.1} parent=19 // pred_check
          %p120 = pneg %p35
        $region22: #{tpu_custom_call.1} parent=19 // pred_check_branch
          %122 = sbr.rel (%p120) target = $region24
        $region23: #{tpu_custom_call.1} parent=19 // pred_region
          %s123 = sand.u32 %s25, 1
          %s124 = scalar_lea.sflag [#allocation4], %s123
          %s125 = sand.u32 %s25, 1
          %s126 = smul.addr %s125, 8
          %s127 = scalar_lea.vmem [#allocation3], %s126
          %s129 = ssub.s32 128, 128
          %130 = vsyncadd %s124, %s129
          %s131 = smul.addr %s15, 2
          %s132 = smul.addr %s131, 64
          %s133 = scalar_lea.hbm %s0, %s132
          %s135 = sshll.u32 %s127, 4
          %s136 = int_to_ptr.vmem [resolvable:$true] %s135
          %138 = dma.hbm_to_vmem [thread:$0]  %s133, 128, %s136, %s124
        $region24: #{tpu_custom_call.1} parent=19 // pred_fallthru
          _
      $region20: #{tpu_custom_call.1} parent=5 // pred_fallthru
        _
      %p139 = scmp.le.s32.totalorder 1, %s15
      %p140 = scmp.lt.s32.totalorder %s15, 3
      %p141 = pnand %p139, %p140
      %p142 = pneg %p141
      // Predicated region
      $region25: #{tpu_custom_call.1} parent=5 // pred_check
        _
      $region26: #{tpu_custom_call.1} parent=5 // pred_check_branch
        %144 = sbr.rel (%p141) target = $region28
      $region27: #{tpu_custom_call.1} parent=5 // pred_region
        %s145 = ssub.s32 %s15, 1
        %s146 = sand.u32 %s28, 1
        %s147 = scalar_lea.sflag [#allocation4], %s146
        %s148 = sand.u32 %s28, 1
        %s149 = smul.addr %s148, 8
        %s150 = scalar_lea.vmem [#allocation3], %s149
        // Predicated region
        $region29: #{tpu_custom_call.1} parent=27 // pred_check
          %p151 = pneg %p41
        $region30: #{tpu_custom_call.1} parent=27 // pred_check_branch
          %153 = sbr.rel (%p151) target = $region32
        $region31: #{tpu_custom_call.1} parent=27 // pred_region
          %154 = dma.done %s147, 128
        $region32: #{tpu_custom_call.1} parent=27 // pred_fallthru
          _
        // Predicated region
        $region33: #{tpu_custom_call.1} parent=27 // pred_check
          %p155 = pneg %p62
        $region34: #{tpu_custom_call.1} parent=27 // pred_check_branch
          %157 = sbr.rel (%p155) target = $region36
        $region35: #{tpu_custom_call.1} parent=27 // pred_region
          %158 = dma.done [#allocation7], 32768
        $region36: #{tpu_custom_call.1} parent=27 // pred_fallthru
          _
        %s159 = sand.u32 %s28, 1
        %s160 = scalar_lea.sflag [#allocation4], %s159
        %s161 = sand.u32 %s28, 1
        %s162 = smul.addr %s161, 8
        %s163 = scalar_lea.vmem [#allocation3], %s162
        %p164 = pneg %p41
        %p165 = pneg %p38
        %p166 = pneg %p62
        %p167 = pneg %p59
        %p168 = pneg %p88
        %p169 = pneg %p85
        %s170 = sand.u32 %s75, 1
        %s171 = scalar_lea.sflag [#allocation5], %s170
        %s172 = sand.u32 %s75, 1
        %s173 = smul.addr %s172, 8
        %s174 = scalar_lea.vmem [#allocation8], %s173
        %v175 = vld [vmem:[%s150] sm:$0xff]
        %v177 = vcombine.high %v175, %v175
        %vm179 = vcmask 1043456
        %v180 = vsel %vm179, %v175, 0.0
        %v181 = vrot.slane %v180, 4
        %v182 = vadd.f32 %v180, %v181
        %v183 = vrot.slane %v182, 2
        %v184 = vadd.f32 %v182, %v183
        %v185 = vrot.slane %v184, 1
        %v186 = vadd.f32 %v184, %v185
        %v187 = vsel %vm179, %v177, 0.0
        %v188 = vrot.slane %v187, 4
        %v189 = vadd.f32 %v187, %v188
        %v190 = vrot.slane %v189, 2
        %v191 = vadd.f32 %v189, %v190
        %v192 = vrot.slane %v191, 1
        %v193 = vadd.f32 %v191, %v192
        %v194 = vmul.f32 %v186, 0.25
        %v195 = vmul.f32 %v193, 0.25
        %v196 = vsel %vm179, %v175, -inf
        %v197 = vrot.slane %v196, 4
        %v198 = vmax.f32 %v196, %v197
        %v199 = vrot.slane %v198, 2
        %v200 = vmax.f32 %v198, %v199
        %v201 = vrot.slane %v200, 1
        %v202 = vmax.f32 %v200, %v201
        %v203 = vsel %vm179, %v177, -inf
        %v204 = vrot.slane %v203, 4
        %v205 = vmax.f32 %v203, %v204
        %v206 = vrot.slane %v205, 2
        %v207 = vmax.f32 %v205, %v206
        %v208 = vrot.slane %v207, 1
        %v209 = vmax.f32 %v207, %v208
        %210 = vst [vmem:[#allocation2] sm:$0xff] 0.0
        %v213 = vcombine.low %v194, %v195
        %v215 = vunpack.c.l.s4 1966171168
        %v216 = vunpack.c.0.s8 %v215
        %v217 = vlaneseq
        %v218 = vshrl.u32 %v217, 7
        %v219 = vsub.s32 %v216, %v218
        %v220 = vrot.slane %v213, %v219
        %v222 = vunpack.c.l.s4 1966171168
        %v223 = vunpack.c.0.s8 %v222
        %v224 = vlaneseq
        %v225 = vshrl.u32 %v224, 7
        %v226 = vsub.s32 %v223, %v225
        %v227 = vrot.slane %v220, %v226
        %v229 = vlaneseq
        %vm230 = vcmp.ge.s32.totalorder %v229, 0
        %vm231 = vcmp.lt.s32.totalorder %v229, 256
        %vm232 = vmand %vm230, %vm231
        %233 = vst.msk [vmem:[#allocation2 + $0x1] sm:$0x3] %vm232, %v227
        %v236 = vcombine.low %v202, %v209
        %v238 = vunpack.c.l.s4 1966171168
        %v239 = vunpack.c.0.s8 %v238
        %v240 = vlaneseq
        %v241 = vshrl.u32 %v240, 7
        %v242 = vsub.s32 %v239, %v241
        %v243 = vrot.slane %v236, %v242
        %v245 = vunpack.c.l.s4 1966171168
        %v246 = vunpack.c.0.s8 %v245
        %v247 = vlaneseq
        %v248 = vshrl.u32 %v247, 7
        %v249 = vsub.s32 %v246, %v248
        %v250 = vrot.slane %v243, %v249
        %252 = vst.msk [vmem:[#allocation2 + $0x5] sm:$0x3] %vm232, %v250
        %v253 = vld [vmem:[#allocation2] sm:$0xff]
        %v254 = vld [vmem:[#allocation6] sm:$0xff]
        %v255 = vld [vmem:[#allocation6 + $0x8] sm:$0xff]
        %v256 = vld [vmem:[#allocation6 + $0x10] sm:$0xff]
        %v257 = vld [vmem:[#allocation6 + $0x18] sm:$0xff]
        %v258 = vld [vmem:[#allocation6 + $0x20] sm:$0xff]
        %v259 = vld [vmem:[#allocation6 + $0x28] sm:$0xff]
        %v260 = vld [vmem:[#allocation6 + $0x30] sm:$0xff]
        %v261 = vld [vmem:[#allocation6 + $0x38] sm:$0xff]
        %v262 = vld [vmem:[#allocation6 + $0x40] sm:$0xff]
        %v263 = vld [vmem:[#allocation6 + $0x48] sm:$0xff]
        %v264 = vld [vmem:[#allocation6 + $0x50] sm:$0xff]
        %v265 = vld [vmem:[#allocation6 + $0x58] sm:$0xff]
        %v266 = vld [vmem:[#allocation6 + $0x60] sm:$0xff]
        %v267 = vld [vmem:[#allocation6 + $0x68] sm:$0xff]
        %v268 = vld [vmem:[#allocation6 + $0x70] sm:$0xff]
        %v269 = vld [vmem:[#allocation6 + $0x78] sm:$0xff]
        %v270 = vld [vmem:[#allocation6 + $0x80] sm:$0xff]
        %v271 = vld [vmem:[#allocation6 + $0x88] sm:$0xff]
        %v272 = vld [vmem:[#allocation6 + $0x90] sm:$0xff]
        %v273 = vld [vmem:[#allocation6 + $0x98] sm:$0xff]
        %v274 = vld [vmem:[#allocation6 + $0xa0] sm:$0xff]
        %v275 = vld [vmem:[#allocation6 + $0xa8] sm:$0xff]
        %v276 = vld [vmem:[#allocation6 + $0xb0] sm:$0xff]
        %v277 = vld [vmem:[#allocation6 + $0xb8] sm:$0xff]
        %v278 = vld [vmem:[#allocation6 + $0xc0] sm:$0xff]
        %v279 = vld [vmem:[#allocation6 + $0xc8] sm:$0xff]
        %v280 = vld [vmem:[#allocation6 + $0xd0] sm:$0xff]
        %v281 = vld [vmem:[#allocation6 + $0xd8] sm:$0xff]
        %v282 = vld [vmem:[#allocation6 + $0xe0] sm:$0xff]
        %v283 = vld [vmem:[#allocation6 + $0xe8] sm:$0xff]
        %v284 = vld [vmem:[#allocation6 + $0xf0] sm:$0xff]
        %v285 = vld [vmem:[#allocation6 + $0xf8] sm:$0xff]
        %v286 = vld [vmem:[#allocation6 + $0x100] sm:$0xff]
        %v287 = vld [vmem:[#allocation6 + $0x108] sm:$0xff]
        %v288 = vld [vmem:[#allocation6 + $0x110] sm:$0xff]
        %v289 = vld [vmem:[#allocation6 + $0x118] sm:$0xff]
        %v290 = vld [vmem:[#allocation6 + $0x120] sm:$0xff]
        %v291 = vld [vmem:[#allocation6 + $0x128] sm:$0xff]
        %v292 = vld [vmem:[#allocation6 + $0x130] sm:$0xff]
        %v293 = vld [vmem:[#allocation6 + $0x138] sm:$0xff]
        %v294 = vld [vmem:[#allocation6 + $0x140] sm:$0xff]
        %v295 = vld [vmem:[#allocation6 + $0x148] sm:$0xff]
        %v296 = vld [vmem:[#allocation6 + $0x150] sm:$0xff]
        %v297 = vld [vmem:[#allocation6 + $0x158] sm:$0xff]
        %v298 = vld [vmem:[#allocation6 + $0x160] sm:$0xff]
        %v299 = vld [vmem:[#allocation6 + $0x168] sm:$0xff]
        %v300 = vld [vmem:[#allocation6 + $0x170] sm:$0xff]
        %v301 = vld [vmem:[#allocation6 + $0x178] sm:$0xff]
        %v302 = vld [vmem:[#allocation6 + $0x180] sm:$0xff]
        %v303 = vld [vmem:[#allocation6 + $0x188] sm:$0xff]
        %v304 = vld [vmem:[#allocation6 + $0x190] sm:$0xff]
        %v305 = vld [vmem:[#allocation6 + $0x198] sm:$0xff]
        %v306 = vld [vmem:[#allocation6 + $0x1a0] sm:$0xff]
        %v307 = vld [vmem:[#allocation6 + $0x1a8] sm:$0xff]
        %v308 = vld [vmem:[#allocation6 + $0x1b0] sm:$0xff]
        %v309 = vld [vmem:[#allocation6 + $0x1b8] sm:$0xff]
        %v310 = vld [vmem:[#allocation6 + $0x1c0] sm:$0xff]
        %v311 = vld [vmem:[#allocation6 + $0x1c8] sm:$0xff]
        %v312 = vld [vmem:[#allocation6 + $0x1d0] sm:$0xff]
        %v313 = vld [vmem:[#allocation6 + $0x1d8] sm:$0xff]
        %v314 = vld [vmem:[#allocation6 + $0x1e0] sm:$0xff]
        %v315 = vld [vmem:[#allocation6 + $0x1e8] sm:$0xff]
        %v316 = vld [vmem:[#allocation6 + $0x1f0] sm:$0xff]
        %v317 = vld [vmem:[#allocation6 + $0x1f8] sm:$0xff]
        %v318 = vld [vmem:[#allocation6 + $0x200] sm:$0xff]
        %v319 = vld [vmem:[#allocation6 + $0x208] sm:$0xff]
        %v320 = vld [vmem:[#allocation6 + $0x210] sm:$0xff]
        %v321 = vld [vmem:[#allocation6 + $0x218] sm:$0xff]
        %v322 = vld [vmem:[#allocation6 + $0x220] sm:$0xff]
        %v323 = vld [vmem:[#allocation6 + $0x228] sm:$0xff]
        %v324 = vld [vmem:[#allocation6 + $0x230] sm:$0xff]
        %v325 = vld [vmem:[#allocation6 + $0x238] sm:$0xff]
        %v326 = vld [vmem:[#allocation6 + $0x240] sm:$0xff]
        %v327 = vld [vmem:[#allocation6 + $0x248] sm:$0xff]
        %v328 = vld [vmem:[#allocation6 + $0x250] sm:$0xff]
        %v329 = vld [vmem:[#allocation6 + $0x258] sm:$0xff]
        %v330 = vld [vmem:[#allocation6 + $0x260] sm:$0xff]
        %v331 = vld [vmem:[#allocation6 + $0x268] sm:$0xff]
        %v332 = vld [vmem:[#allocation6 + $0x270] sm:$0xff]
        %v333 = vld [vmem:[#allocation6 + $0x278] sm:$0xff]
        %v334 = vld [vmem:[#allocation6 + $0x280] sm:$0xff]
        %v335 = vld [vmem:[#allocation6 + $0x288] sm:$0xff]
        %v336 = vld [vmem:[#allocation6 + $0x290] sm:$0xff]
        %v337 = vld [vmem:[#allocation6 + $0x298] sm:$0xff]
        %v338 = vld [vmem:[#allocation6 + $0x2a0] sm:$0xff]
        %v339 = vld [vmem:[#allocation6 + $0x2a8] sm:$0xff]
        %v340 = vld [vmem:[#allocation6 + $0x2b0] sm:$0xff]
        %v341 = vld [vmem:[#allocation6 + $0x2b8] sm:$0xff]
        %v342 = vld [vmem:[#allocation6 + $0x2c0] sm:$0xff]
        %v343 = vld [vmem:[#allocation6 + $0x2c8] sm:$0xff]
        %v344 = vld [vmem:[#allocation6 + $0x2d0] sm:$0xff]
        %v345 = vld [vmem:[#allocation6 + $0x2d8] sm:$0xff]
        %v346 = vld [vmem:[#allocation6 + $0x2e0] sm:$0xff]
        %v347 = vld [vmem:[#allocation6 + $0x2e8] sm:$0xff]
        %v348 = vld [vmem:[#allocation6 + $0x2f0] sm:$0xff]
        %v349 = vld [vmem:[#allocation6 + $0x2f8] sm:$0xff]
        %v350 = vld [vmem:[#allocation6 + $0x300] sm:$0xff]
        %v351 = vld [vmem:[#allocation6 + $0x308] sm:$0xff]
        %v352 = vld [vmem:[#allocation6 + $0x310] sm:$0xff]
        %v353 = vld [vmem:[#allocation6 + $0x318] sm:$0xff]
        %v354 = vld [vmem:[#allocation6 + $0x320] sm:$0xff]
        %v355 = vld [vmem:[#allocation6 + $0x328] sm:$0xff]
        %v356 = vld [vmem:[#allocation6 + $0x330] sm:$0xff]
        %v357 = vld [vmem:[#allocation6 + $0x338] sm:$0xff]
        %v358 = vld [vmem:[#allocation6 + $0x340] sm:$0xff]
        %v359 = vld [vmem:[#allocation6 + $0x348] sm:$0xff]
        %v360 = vld [vmem:[#allocation6 + $0x350] sm:$0xff]
        %v361 = vld [vmem:[#allocation6 + $0x358] sm:$0xff]
        %v362 = vld [vmem:[#allocation6 + $0x360] sm:$0xff]
        %v363 = vld [vmem:[#allocation6 + $0x368] sm:$0xff]
        %v364 = vld [vmem:[#allocation6 + $0x370] sm:$0xff]
        %v365 = vld [vmem:[#allocation6 + $0x378] sm:$0xff]
        %v366 = vld [vmem:[#allocation6 + $0x380] sm:$0xff]
        %v367 = vld [vmem:[#allocation6 + $0x388] sm:$0xff]
        %v368 = vld [vmem:[#allocation6 + $0x390] sm:$0xff]
        %v369 = vld [vmem:[#allocation6 + $0x398] sm:$0xff]
        %v370 = vld [vmem:[#allocation6 + $0x3a0] sm:$0xff]
        %v371 = vld [vmem:[#allocation6 + $0x3a8] sm:$0xff]
        %v372 = vld [vmem:[#allocation6 + $0x3b0] sm:$0xff]
        %v373 = vld [vmem:[#allocation6 + $0x3b8] sm:$0xff]
        %v374 = vld [vmem:[#allocation6 + $0x3c0] sm:$0xff]
        %v375 = vld [vmem:[#allocation6 + $0x3c8] sm:$0xff]
        %v376 = vld [vmem:[#allocation6 + $0x3d0] sm:$0xff]
        %v377 = vld [vmem:[#allocation6 + $0x3d8] sm:$0xff]
        %v378 = vld [vmem:[#allocation6 + $0x3e0] sm:$0xff]
        %v379 = vld [vmem:[#allocation6 + $0x3e8] sm:$0xff]
        %v380 = vld [vmem:[#allocation6 + $0x3f0] sm:$0xff]
        %v381 = vld [vmem:[#allocation6 + $0x3f8] sm:$0xff]
        %v382 = vld [vmem:[#allocation6 + $0x400] sm:$0xff]
        %v383 = vld [vmem:[#allocation6 + $0x408] sm:$0xff]
        %v384 = vld [vmem:[#allocation6 + $0x410] sm:$0xff]
        %v385 = vld [vmem:[#allocation6 + $0x418] sm:$0xff]
        %v386 = vld [vmem:[#allocation6 + $0x420] sm:$0xff]
        %v387 = vld [vmem:[#allocation6 + $0x428] sm:$0xff]
        %v388 = vld [vmem:[#allocation6 + $0x430] sm:$0xff]
        %v389 = vld [vmem:[#allocation6 + $0x438] sm:$0xff]
        %v390 = vld [vmem:[#allocation6 + $0x440] sm:$0xff]
        %v391 = vld [vmem:[#allocation6 + $0x448] sm:$0xff]
        %v392 = vld [vmem:[#allocation6 + $0x450] sm:$0xff]
        %v393 = vld [vmem:[#allocation6 + $0x458] sm:$0xff]
        %v394 = vld [vmem:[#allocation6 + $0x460] sm:$0xff]
        %v395 = vld [vmem:[#allocation6 + $0x468] sm:$0xff]
        %v396 = vld [vmem:[#allocation6 + $0x470] sm:$0xff]
        %v397 = vld [vmem:[#allocation6 + $0x478] sm:$0xff]
        %v398 = vld [vmem:[#allocation6 + $0x480] sm:$0xff]
        %v399 = vld [vmem:[#allocation6 + $0x488] sm:$0xff]
        %v400 = vld [vmem:[#allocation6 + $0x490] sm:$0xff]
        %v401 = vld [vmem:[#allocation6 + $0x498] sm:$0xff]
        %v402 = vld [vmem:[#allocation6 + $0x4a0] sm:$0xff]
        %v403 = vld [vmem:[#allocation6 + $0x4a8] sm:$0xff]
        %v404 = vld [vmem:[#allocation6 + $0x4b0] sm:$0xff]
        %v405 = vld [vmem:[#allocation6 + $0x4b8] sm:$0xff]
        %v406 = vld [vmem:[#allocation6 + $0x4c0] sm:$0xff]
        %v407 = vld [vmem:[#allocation6 + $0x4c8] sm:$0xff]
        %v408 = vld [vmem:[#allocation6 + $0x4d0] sm:$0xff]
        %v409 = vld [vmem:[#allocation6 + $0x4d8] sm:$0xff]
        %v410 = vld [vmem:[#allocation6 + $0x4e0] sm:$0xff]
        %v411 = vld [vmem:[#allocation6 + $0x4e8] sm:$0xff]
        %v412 = vld [vmem:[#allocation6 + $0x4f0] sm:$0xff]
        %v413 = vld [vmem:[#allocation6 + $0x4f8] sm:$0xff]
        %v414 = vld [vmem:[#allocation6 + $0x500] sm:$0xff]
        %v415 = vld [vmem:[#allocation6 + $0x508] sm:$0xff]
        %v416 = vld [vmem:[#allocation6 + $0x510] sm:$0xff]
        %v417 = vld [vmem:[#allocation6 + $0x518] sm:$0xff]
        %v418 = vld [vmem:[#allocation6 + $0x520] sm:$0xff]
        %v419 = vld [vmem:[#allocation6 + $0x528] sm:$0xff]
        %v420 = vld [vmem:[#allocation6 + $0x530] sm:$0xff]
        %v421 = vld [vmem:[#allocation6 + $0x538] sm:$0xff]
        %v422 = vld [vmem:[#allocation6 + $0x540] sm:$0xff]
        %v423 = vld [vmem:[#allocation6 + $0x548] sm:$0xff]
        %v424 = vld [vmem:[#allocation6 + $0x550] sm:$0xff]
        %v425 = vld [vmem:[#allocation6 + $0x558] sm:$0xff]
        %v426 = vld [vmem:[#allocation6 + $0x560] sm:$0xff]
        %v427 = vld [vmem:[#allocation6 + $0x568] sm:$0xff]
        %v428 = vld [vmem:[#allocation6 + $0x570] sm:$0xff]
        %v429 = vld [vmem:[#allocation6 + $0x578] sm:$0xff]
        %v430 = vld [vmem:[#allocation6 + $0x580] sm:$0xff]
        %v431 = vld [vmem:[#allocation6 + $0x588] sm:$0xff]
        %v432 = vld [vmem:[#allocation6 + $0x590] sm:$0xff]
        %v433 = vld [vmem:[#allocation6 + $0x598] sm:$0xff]
        %v434 = vld [vmem:[#allocation6 + $0x5a0] sm:$0xff]
        %v435 = vld [vmem:[#allocation6 + $0x5a8] sm:$0xff]
        %v436 = vld [vmem:[#allocation6 + $0x5b0] sm:$0xff]
        %v437 = vld [vmem:[#allocation6 + $0x5b8] sm:$0xff]
        %v438 = vld [vmem:[#allocation6 + $0x5c0] sm:$0xff]
        %v439 = vld [vmem:[#allocation6 + $0x5c8] sm:$0xff]
        %v440 = vld [vmem:[#allocation6 + $0x5d0] sm:$0xff]
        %v441 = vld [vmem:[#allocation6 + $0x5d8] sm:$0xff]
        %v442 = vld [vmem:[#allocation6 + $0x5e0] sm:$0xff]
        %v443 = vld [vmem:[#allocation6 + $0x5e8] sm:$0xff]
        %v444 = vld [vmem:[#allocation6 + $0x5f0] sm:$0xff]
        %v445 = vld [vmem:[#allocation6 + $0x5f8] sm:$0xff]
        %v446 = vld [vmem:[#allocation6 + $0x600] sm:$0xff]
        %v447 = vld [vmem:[#allocation6 + $0x608] sm:$0xff]
        %v448 = vld [vmem:[#allocation6 + $0x610] sm:$0xff]
        %v449 = vld [vmem:[#allocation6 + $0x618] sm:$0xff]
        %v450 = vld [vmem:[#allocation6 + $0x620] sm:$0xff]
        %v451 = vld [vmem:[#allocation6 + $0x628] sm:$0xff]
        %v452 = vld [vmem:[#allocation6 + $0x630] sm:$0xff]
        %v453 = vld [vmem:[#allocation6 + $0x638] sm:$0xff]
        %v454 = vld [vmem:[#allocation6 + $0x640] sm:$0xff]
        %v455 = vld [vmem:[#allocation6 + $0x648] sm:$0xff]
        %v456 = vld [vmem:[#allocation6 + $0x650] sm:$0xff]
        %v457 = vld [vmem:[#allocation6 + $0x658] sm:$0xff]
        %v458 = vld [vmem:[#allocation6 + $0x660] sm:$0xff]
        %v459 = vld [vmem:[#allocation6 + $0x668] sm:$0xff]
        %v460 = vld [vmem:[#allocation6 + $0x670] sm:$0xff]
        %v461 = vld [vmem:[#allocation6 + $0x678] sm:$0xff]
        %v462 = vld [vmem:[#allocation6 + $0x680] sm:$0xff]
        %v463 = vld [vmem:[#allocation6 + $0x688] sm:$0xff]
        %v464 = vld [vmem:[#allocation6 + $0x690] sm:$0xff]
        %v465 = vld [vmem:[#allocation6 + $0x698] sm:$0xff]
        %v466 = vld [vmem:[#allocation6 + $0x6a0] sm:$0xff]
        %v467 = vld [vmem:[#allocation6 + $0x6a8] sm:$0xff]
        %v468 = vld [vmem:[#allocation6 + $0x6b0] sm:$0xff]
        %v469 = vld [vmem:[#allocation6 + $0x6b8] sm:$0xff]
        %v470 = vld [vmem:[#allocation6 + $0x6c0] sm:$0xff]
        %v471 = vld [vmem:[#allocation6 + $0x6c8] sm:$0xff]
        %v472 = vld [vmem:[#allocation6 + $0x6d0] sm:$0xff]
        %v473 = vld [vmem:[#allocation6 + $0x6d8] sm:$0xff]
        %v474 = vld [vmem:[#allocation6 + $0x6e0] sm:$0xff]
        %v475 = vld [vmem:[#allocation6 + $0x6e8] sm:$0xff]
        %v476 = vld [vmem:[#allocation6 + $0x6f0] sm:$0xff]
        %v477 = vld [vmem:[#allocation6 + $0x6f8] sm:$0xff]
        %v478 = vld [vmem:[#allocation6 + $0x700] sm:$0xff]
        %v479 = vld [vmem:[#allocation6 + $0x708] sm:$0xff]
        %v480 = vld [vmem:[#allocation6 + $0x710] sm:$0xff]
        %v481 = vld [vmem:[#allocation6 + $0x718] sm:$0xff]
        %v482 = vld [vmem:[#allocation6 + $0x720] sm:$0xff]
        %v483 = vld [vmem:[#allocation6 + $0x728] sm:$0xff]
        %v484 = vld [vmem:[#allocation6 + $0x730] sm:$0xff]
        %v485 = vld [vmem:[#allocation6 + $0x738] sm:$0xff]
        %v486 = vld [vmem:[#allocation6 + $0x740] sm:$0xff]
        %v487 = vld [vmem:[#allocation6 + $0x748] sm:$0xff]
        %v488 = vld [vmem:[#allocation6 + $0x750] sm:$0xff]
        %v489 = vld [vmem:[#allocation6 + $0x758] sm:$0xff]
        %v490 = vld [vmem:[#allocation6 + $0x760] sm:$0xff]
        %v491 = vld [vmem:[#allocation6 + $0x768] sm:$0xff]
        %v492 = vld [vmem:[#allocation6 + $0x770] sm:$0xff]
        %v493 = vld [vmem:[#allocation6 + $0x778] sm:$0xff]
        %v494 = vld [vmem:[#allocation6 + $0x780] sm:$0xff]
        %v495 = vld [vmem:[#allocation6 + $0x788] sm:$0xff]
        %v496 = vld [vmem:[#allocation6 + $0x790] sm:$0xff]
        %v497 = vld [vmem:[#allocation6 + $0x798] sm:$0xff]
        %v498 = vld [vmem:[#allocation6 + $0x7a0] sm:$0xff]
        %v499 = vld [vmem:[#allocation6 + $0x7a8] sm:$0xff]
        %v500 = vld [vmem:[#allocation6 + $0x7b0] sm:$0xff]
        %v501 = vld [vmem:[#allocation6 + $0x7b8] sm:$0xff]
        %v502 = vld [vmem:[#allocation6 + $0x7c0] sm:$0xff]
        %v503 = vld [vmem:[#allocation6 + $0x7c8] sm:$0xff]
        %v504 = vld [vmem:[#allocation6 + $0x7d0] sm:$0xff]
        %v505 = vld [vmem:[#allocation6 + $0x7d8] sm:$0xff]
        %v506 = vld [vmem:[#allocation6 + $0x7e0] sm:$0xff]
        %v507 = vld [vmem:[#allocation6 + $0x7e8] sm:$0xff]
        %v508 = vld [vmem:[#allocation6 + $0x7f0] sm:$0xff]
        %v509 = vld [vmem:[#allocation6 + $0x7f8] sm:$0xff]
        %v511 = vlaneseq
        %v512 = vshrl.u32 %v511, 7
        %v513 = vsub.s32 0, %v512
        %v514 = vrot.slane %v253, %v513
        %v515 = vlaneseq
        %v516 = vshrl.u32 %v515, 7
        %v517 = vsub.s32 1, %v516
        %v518 = vrot.slane %v253, %v517
        %v519 = vlaneseq
        %v520 = vshrl.u32 %v519, 7
        %v521 = vsub.s32 2, %v520
        %v522 = vrot.slane %v253, %v521
        %v523 = vlaneseq
        %v524 = vshrl.u32 %v523, 7
        %v525 = vsub.s32 3, %v524
        %v526 = vrot.slane %v253, %v525
        %v527 = vlaneseq
        %v528 = vshrl.u32 %v527, 7
        %v529 = vsub.s32 4, %v528
        %v530 = vrot.slane %v253, %v529
        %v531 = vlaneseq
        %v532 = vshrl.u32 %v531, 7
        %v533 = vsub.s32 5, %v532
        %v534 = vrot.slane %v253, %v533
        %v535 = vlaneseq
        %v536 = vshrl.u32 %v535, 7
        %v537 = vsub.s32 6, %v536
        %v538 = vrot.slane %v253, %v537
        %v539 = vlaneseq
        %v540 = vshrl.u32 %v539, 7
        %v541 = vsub.s32 7, %v540
        %v542 = vrot.slane %v253, %v541
        %551 = vmatprep.subr.mxu0 %v255
        %552 = vmatpush1.msra.mxu0 %v254
        %553 = vmatprep.subr.mxu0 %v257
        %554 = vmatpush1.msra.mxu0 %v256
        %555 = vmatprep.subr.mxu0 %v259
        %556 = vmatpush1.msra.mxu0 %v258
        %557 = vmatprep.subr.mxu0 %v261
        %558 = vmatpush1.msra.mxu0 %v260
        %559 = vmatprep.subr.mxu0 %v263
        %560 = vmatpush1.msra.mxu0 %v262
        %561 = vmatprep.subr.mxu0 %v265
        %562 = vmatpush1.msra.mxu0 %v264
        %563 = vmatprep.subr.mxu0 %v267
        %564 = vmatpush1.msra.mxu0 %v266
        %565 = vmatprep.subr.mxu0 %v269
        %566 = vmatpush1.msra.mxu0 %v268
        %567 = vmatprep.subr.mxu0 %v271
        %568 = vmatpush1.msra.mxu0 %v270
        %569 = vmatprep.subr.mxu0 %v273
        %570 = vmatpush1.msra.mxu0 %v272
        %571 = vmatprep.subr.mxu0 %v275
        %572 = vmatpush1.msra.mxu0 %v274
        %573 = vmatprep.subr.mxu0 %v277
        %574 = vmatpush1.msra.mxu0 %v276
        %575 = vmatprep.subr.mxu0 %v279
        %576 = vmatpush1.msra.mxu0 %v278
        %577 = vmatprep.subr.mxu0 %v281
        %578 = vmatpush1.msra.mxu0 %v280
        %579 = vmatprep.subr.mxu0 %v283
        %580 = vmatpush1.msra.mxu0 %v282
        %581 = vmatprep.subr.mxu0 %v285
        %582 = vmatpush1.msra.mxu0 %v284
        %583 = vmatprep.subr.mxu0 %v287
        %584 = vmatpush1.msra.mxu0 %v286
        %585 = vmatprep.subr.mxu0 %v289
        %586 = vmatpush1.msra.mxu0 %v288
        %587 = vmatprep.subr.mxu0 %v291
        %588 = vmatpush1.msra.mxu0 %v290
        %589 = vmatprep.subr.mxu0 %v293
        %590 = vmatpush1.msra.mxu0 %v292
        %591 = vmatprep.subr.mxu0 %v295
        %592 = vmatpush1.msra.mxu0 %v294
        %593 = vmatprep.subr.mxu0 %v297
        %594 = vmatpush1.msra.mxu0 %v296
        %595 = vmatprep.subr.mxu0 %v299
        %596 = vmatpush1.msra.mxu0 %v298
        %597 = vmatprep.subr.mxu0 %v301
        %598 = vmatpush1.msra.mxu0 %v300
        %599 = vmatprep.subr.mxu0 %v303
        %600 = vmatpush1.msra.mxu0 %v302
        %601 = vmatprep.subr.mxu0 %v305
        %602 = vmatpush1.msra.mxu0 %v304
        %603 = vmatprep.subr.mxu0 %v307
        %604 = vmatpush1.msra.mxu0 %v306
        %605 = vmatprep.subr.mxu0 %v309
        %606 = vmatpush1.msra.mxu0 %v308
        %607 = vmatprep.subr.mxu0 %v311
        %608 = vmatpush1.msra.mxu0 %v310
        %609 = vmatprep.subr.mxu0 %v313
        %610 = vmatpush1.msra.mxu0 %v312
        %611 = vmatprep.subr.mxu0 %v315
        %612 = vmatpush1.msra.mxu0 %v314
        %613 = vmatprep.subr.mxu0 %v317
        %614 = vmatpush1.msra.mxu0 %v316
        %615 = vmatprep.mubr.f32.mxu0 %v518
        %616 = vmatmul.mubr.f32.gmra.mrb[0].mxu0 %v514
        %v617 = vpop.f32.mrb[0].mxu0
        %v618 = vadd.f32 0.0, %v617
        %v619 = vpop.f32.mrb[0].mxu0
        %v620 = vadd.f32 0.0, %v619
        %621 = vdwg.mxu0
        %622 = vmatprep.subr.mxu0 %v319
        %623 = vmatpush1.msra.mxu0 %v318
        %624 = vmatprep.subr.mxu0 %v321
        %625 = vmatpush1.msra.mxu0 %v320
        %626 = vmatprep.subr.mxu0 %v323
        %627 = vmatpush1.msra.mxu0 %v322
        %628 = vmatprep.subr.mxu0 %v325
        %629 = vmatpush1.msra.mxu0 %v324
        %630 = vmatprep.subr.mxu0 %v327
        %631 = vmatpush1.msra.mxu0 %v326
        %632 = vmatprep.subr.mxu0 %v329
        %633 = vmatpush1.msra.mxu0 %v328
        %634 = vmatprep.subr.mxu0 %v331
        %635 = vmatpush1.msra.mxu0 %v330
        %636 = vmatprep.subr.mxu0 %v333
        %637 = vmatpush1.msra.mxu0 %v332
        %638 = vmatprep.subr.mxu0 %v335
        %639 = vmatpush1.msra.mxu0 %v334
        %640 = vmatprep.subr.mxu0 %v337
        %641 = vmatpush1.msra.mxu0 %v336
        %642 = vmatprep.subr.mxu0 %v339
        %643 = vmatpush1.msra.mxu0 %v338
        %644 = vmatprep.subr.mxu0 %v341
        %645 = vmatpush1.msra.mxu0 %v340
        %646 = vmatprep.subr.mxu0 %v343
        %647 = vmatpush1.msra.mxu0 %v342
        %648 = vmatprep.subr.mxu0 %v345
        %649 = vmatpush1.msra.mxu0 %v344
        %650 = vmatprep.subr.mxu0 %v347
        %651 = vmatpush1.msra.mxu0 %v346
        %652 = vmatprep.subr.mxu0 %v349
        %653 = vmatpush1.msra.mxu0 %v348
        %654 = vmatprep.subr.mxu0 %v351
        %655 = vmatpush1.msra.mxu0 %v350
        %656 = vmatprep.subr.mxu0 %v353
        %657 = vmatpush1.msra.mxu0 %v352
        %658 = vmatprep.subr.mxu0 %v355
        %659 = vmatpush1.msra.mxu0 %v354
        %660 = vmatprep.subr.mxu0 %v357
        %661 = vmatpush1.msra.mxu0 %v356
        %662 = vmatprep.subr.mxu0 %v359
        %663 = vmatpush1.msra.mxu0 %v358
        %664 = vmatprep.subr.mxu0 %v361
        %665 = vmatpush1.msra.mxu0 %v360
        %666 = vmatprep.subr.mxu0 %v363
        %667 = vmatpush1.msra.mxu0 %v362
        %668 = vmatprep.subr.mxu0 %v365
        %669 = vmatpush1.msra.mxu0 %v364
        %670 = vmatprep.subr.mxu0 %v367
        %671 = vmatpush1.msra.mxu0 %v366
        %672 = vmatprep.subr.mxu0 %v369
        %673 = vmatpush1.msra.mxu0 %v368
        %674 = vmatprep.subr.mxu0 %v371
        %675 = vmatpush1.msra.mxu0 %v370
        %676 = vmatprep.subr.mxu0 %v373
        %677 = vmatpush1.msra.mxu0 %v372
        %678 = vmatprep.subr.mxu0 %v375
        %679 = vmatpush1.msra.mxu0 %v374
        %680 = vmatprep.subr.mxu0 %v377
        %681 = vmatpush1.msra.mxu0 %v376
        %682 = vmatprep.subr.mxu0 %v379
        %683 = vmatpush1.msra.mxu0 %v378
        %684 = vmatprep.subr.mxu0 %v381
        %685 = vmatpush1.msra.mxu0 %v380
        %686 = vmatprep.mubr.f32.mxu0 %v526
        %687 = vmatmul.mubr.f32.gmra.mrb[0].mxu0 %v522
        %v688 = vpop.f32.mrb[0].mxu0
        %v689 = vadd.f32 %v618, %v688
        %v690 = vpop.f32.mrb[0].mxu0
        %v691 = vadd.f32 %v620, %v690
        %692 = vdwg.mxu0
        %693 = vmatprep.subr.mxu0 %v383
        %694 = vmatpush1.msra.mxu0 %v382
        %695 = vmatprep.subr.mxu0 %v385
        %696 = vmatpush1.msra.mxu0 %v384
        %697 = vmatprep.subr.mxu0 %v387
        %698 = vmatpush1.msra.mxu0 %v386
        %699 = vmatprep.subr.mxu0 %v389
        %700 = vmatpush1.msra.mxu0 %v388
        %701 = vmatprep.subr.mxu0 %v391
        %702 = vmatpush1.msra.mxu0 %v390
        %703 = vmatprep.subr.mxu0 %v393
        %704 = vmatpush1.msra.mxu0 %v392
        %705 = vmatprep.subr.mxu0 %v395
        %706 = vmatpush1.msra.mxu0 %v394
        %707 = vmatprep.subr.mxu0 %v397
        %708 = vmatpush1.msra.mxu0 %v396
        %709 = vmatprep.subr.mxu0 %v399
        %710 = vmatpush1.msra.mxu0 %v398
        %711 = vmatprep.subr.mxu0 %v401
        %712 = vmatpush1.msra.mxu0 %v400
        %713 = vmatprep.subr.mxu0 %v403
        %714 = vmatpush1.msra.mxu0 %v402
        %715 = vmatprep.subr.mxu0 %v405
        %716 = vmatpush1.msra.mxu0 %v404
        %717 = vmatprep.subr.mxu0 %v407
        %718 = vmatpush1.msra.mxu0 %v406
        %719 = vmatprep.subr.mxu0 %v409
        %720 = vmatpush1.msra.mxu0 %v408
        %721 = vmatprep.subr.mxu0 %v411
        %722 = vmatpush1.msra.mxu0 %v410
        %723 = vmatprep.subr.mxu0 %v413
        %724 = vmatpush1.msra.mxu0 %v412
        %725 = vmatprep.subr.mxu0 %v415
        %726 = vmatpush1.msra.mxu0 %v414
        %727 = vmatprep.subr.mxu0 %v417
        %728 = vmatpush1.msra.mxu0 %v416
        %729 = vmatprep.subr.mxu0 %v419
        %730 = vmatpush1.msra.mxu0 %v418
        %731 = vmatprep.subr.mxu0 %v421
        %732 = vmatpush1.msra.mxu0 %v420
        %733 = vmatprep.subr.mxu0 %v423
        %734 = vmatpush1.msra.mxu0 %v422
        %735 = vmatprep.subr.mxu0 %v425
        %736 = vmatpush1.msra.mxu0 %v424
        %737 = vmatprep.subr.mxu0 %v427
        %738 = vmatpush1.msra.mxu0 %v426
        %739 = vmatprep.subr.mxu0 %v429
        %740 = vmatpush1.msra.mxu0 %v428
        %741 = vmatprep.subr.mxu0 %v431
        %742 = vmatpush1.msra.mxu0 %v430
        %743 = vmatprep.subr.mxu0 %v433
        %744 = vmatpush1.msra.mxu0 %v432
        %745 = vmatprep.subr.mxu0 %v435
        %746 = vmatpush1.msra.mxu0 %v434
        %747 = vmatprep.subr.mxu0 %v437
        %748 = vmatpush1.msra.mxu0 %v436
        %749 = vmatprep.subr.mxu0 %v439
        %750 = vmatpush1.msra.mxu0 %v438
        %751 = vmatprep.subr.mxu0 %v441
        %752 = vmatpush1.msra.mxu0 %v440
        %753 = vmatprep.subr.mxu0 %v443
        %754 = vmatpush1.msra.mxu0 %v442
        %755 = vmatprep.subr.mxu0 %v445
        %756 = vmatpush1.msra.mxu0 %v444
        %757 = vmatprep.mubr.f32.mxu0 %v534
        %758 = vmatmul.mubr.f32.gmra.mrb[0].mxu0 %v530
        %v759 = vpop.f32.mrb[0].mxu0
        %v760 = vadd.f32 %v689, %v759
        %v761 = vpop.f32.mrb[0].mxu0
        %v762 = vadd.f32 %v691, %v761
        %763 = vdwg.mxu0
        %764 = vmatprep.subr.mxu0 %v447
        %765 = vmatpush1.msra.mxu0 %v446
        %766 = vmatprep.subr.mxu0 %v449
        %767 = vmatpush1.msra.mxu0 %v448
        %768 = vmatprep.subr.mxu0 %v451
        %769 = vmatpush1.msra.mxu0 %v450
        %770 = vmatprep.subr.mxu0 %v453
        %771 = vmatpush1.msra.mxu0 %v452
        %772 = vmatprep.subr.mxu0 %v455
        %773 = vmatpush1.msra.mxu0 %v454
        %774 = vmatprep.subr.mxu0 %v457
        %775 = vmatpush1.msra.mxu0 %v456
        %776 = vmatprep.subr.mxu0 %v459
        %777 = vmatpush1.msra.mxu0 %v458
        %778 = vmatprep.subr.mxu0 %v461
        %779 = vmatpush1.msra.mxu0 %v460
        %780 = vmatprep.subr.mxu0 %v463
        %781 = vmatpush1.msra.mxu0 %v462
        %782 = vmatprep.subr.mxu0 %v465
        %783 = vmatpush1.msra.mxu0 %v464
        %784 = vmatprep.subr.mxu0 %v467
        %785 = vmatpush1.msra.mxu0 %v466
        %786 = vmatprep.subr.mxu0 %v469
        %787 = vmatpush1.msra.mxu0 %v468
        %788 = vmatprep.subr.mxu0 %v471
        %789 = vmatpush1.msra.mxu0 %v470
        %790 = vmatprep.subr.mxu0 %v473
        %791 = vmatpush1.msra.mxu0 %v472
        %792 = vmatprep.subr.mxu0 %v475
        %793 = vmatpush1.msra.mxu0 %v474
        %794 = vmatprep.subr.mxu0 %v477
        %795 = vmatpush1.msra.mxu0 %v476
        %796 = vmatprep.subr.mxu0 %v479
        %797 = vmatpush1.msra.mxu0 %v478
        %798 = vmatprep.subr.mxu0 %v481
        %799 = vmatpush1.msra.mxu0 %v480
        %800 = vmatprep.subr.mxu0 %v483
        %801 = vmatpush1.msra.mxu0 %v482
        %802 = vmatprep.subr.mxu0 %v485
        %803 = vmatpush1.msra.mxu0 %v484
        %804 = vmatprep.subr.mxu0 %v487
        %805 = vmatpush1.msra.mxu0 %v486
        %806 = vmatprep.subr.mxu0 %v489
        %807 = vmatpush1.msra.mxu0 %v488
        %808 = vmatprep.subr.mxu0 %v491
        %809 = vmatpush1.msra.mxu0 %v490
        %810 = vmatprep.subr.mxu0 %v493
        %811 = vmatpush1.msra.mxu0 %v492
        %812 = vmatprep.subr.mxu0 %v495
        %813 = vmatpush1.msra.mxu0 %v494
        %814 = vmatprep.subr.mxu0 %v497
        %815 = vmatpush1.msra.mxu0 %v496
        %816 = vmatprep.subr.mxu0 %v499
        %817 = vmatpush1.msra.mxu0 %v498
        %818 = vmatprep.subr.mxu0 %v501
        %819 = vmatpush1.msra.mxu0 %v500
        %820 = vmatprep.subr.mxu0 %v503
        %821 = vmatpush1.msra.mxu0 %v502
        %822 = vmatprep.subr.mxu0 %v505
        %823 = vmatpush1.msra.mxu0 %v504
        %824 = vmatprep.subr.mxu0 %v507
        %825 = vmatpush1.msra.mxu0 %v506
        %826 = vmatprep.subr.mxu0 %v509
        %827 = vmatpush1.msra.mxu0 %v508
        %828 = vmatprep.mubr.f32.mxu0 %v542
        %829 = vmatmul.mubr.f32.gmra.mrb[0].mxu0 %v538
        %v830 = vpop.f32.mrb[0].mxu0
        %v831 = vadd.f32 %v760, %v830
        %v832 = vpop.f32.mrb[0].mxu0
        %v833 = vadd.f32 %v762, %v832
        %834 = vdwg.mxu0
        %v835 = vxor.u32 %v831, 2147483648
        %v836 = vxor.u32 %v833, 2147483648
        %v837 = vmul.f32 %v835, 1.442695
        %v838 = vpow.pop %v837
        %v839 = vmul.f32 %v836, 1.442695
        %v840 = vpow.pop %v839
        %v841 = vadd.f32 %v838, 1.0
        %v842 = vadd.f32 %v840, 1.0
        %v843 = vrcp.pop %v841
        %v844 = vmul.f32 1.0, %v843
        %v845 = vrcp.pop %v842
        %v846 = vmul.f32 1.0, %v845
        %v847 = vlaneseq
        %v848 = vshrl.u32 %v847, 7
        %v849 = vsub.s32 0, %v848
        %v850 = vrot.slane %v844, %v849
        %v851 = vlaneseq
        %v852 = vshrl.u32 %v851, 7
        %v853 = vsub.s32 0, %v852
        %v854 = vrot.slane %v846, %v853
        %v857 = vcombine.low %v850, %v854
        %v859 = vmul.f32 %v175, %v857
        %860 = vst [vmem:[%s174] sm:$0xff] %v859
        %s861 = sand.u32 %s75, 1
        %s862 = scalar_lea.sflag [#allocation5], %s861
        %s863 = sand.u32 %s75, 1
        %s864 = smul.addr %s863, 8
        %s865 = scalar_lea.vmem [#allocation8], %s864
        // Predicated region
        $region37: #{tpu_custom_call.1} parent=27 // pred_check
          %p866 = pneg %p85
        $region38: #{tpu_custom_call.1} parent=27 // pred_check_branch
          %868 = sbr.rel (%p866) target = $region40
        $region39: #{tpu_custom_call.1} parent=27 // pred_region
          %s870 = ssub.s32 128, 128
          %871 = vsyncadd %s862, %s870
          %s872 = smul.addr %s20, 2
          %s873 = smul.addr %s872, 64
          %s874 = scalar_lea.hbm %s2, %s873
          %s876 = sshll.u32 %s865, 4
          %s877 = int_to_ptr.vmem [resolvable:$true] %s876
          %879 = dma.vmem_to_hbm [thread:$0]  %s877, 128, %s874, %s862
        $region40: #{tpu_custom_call.1} parent=27 // pred_fallthru
          _
      $region28: #{tpu_custom_call.1} parent=5 // pred_fallthru
        _
      %p880 = scmp.le.s32.totalorder 2, %s15
      // Predicated region
      $region41: #{tpu_custom_call.1} parent=5 // pred_check
        %p881 = pneg %p880
      $region42: #{tpu_custom_call.1} parent=5 // pred_check_branch
        %883 = sbr.rel (%p881) target = $region44
      $region43: #{tpu_custom_call.1} parent=5 // pred_region
        %s884 = ssub.s32 %s15, 2
        // Predicated region
        $region45: #{tpu_custom_call.1} parent=43 // pred_check
          %p885 = pneg %p91
        $region46: #{tpu_custom_call.1} parent=43 // pred_check_branch
          %887 = sbr.rel (%p885) target = $region48
        $region47: #{tpu_custom_call.1} parent=43 // pred_region
          %s888 = sand.u32 %s76, 1
          %s889 = scalar_lea.sflag [#allocation5], %s888
          %s890 = sand.u32 %s76, 1
          %s891 = smul.addr %s890, 8
          %s892 = scalar_lea.vmem [#allocation8], %s891
          %893 = dma.done %s889, 128
        $region48: #{tpu_custom_call.1} parent=43 // pred_fallthru
          _
      $region44: #{tpu_custom_call.1} parent=5 // pred_fallthru
        _
    $region6: #{tpu_custom_call.1} parent=1 // loop_footer
      %s19 = sadd.s32 1, %s15
    $region7: #{tpu_custom_call.1} parent=1 // loop_footer_branch
      %14 = sbr.rel target = $region3
    $region8: #{tpu_custom_call.1} parent=1 // loop_exit
      _
    %894 = vsyncpa [#allocation4], 1
    %s895 = scalar_lea.sflag [#allocation4], 1
    %896 = vsyncpa %s895, 1
    %897 = vsyncpa [#allocation7], 1
    %898 = vsyncpa [#allocation5], 1
    %s899 = scalar_lea.sflag [#allocation5], 1
    %900 = vsyncpa %s899, 1

</llo_original>
